<compile_context>
chip_gen: v6e
topology: v6e:2x2x1
jax: 0.10.0
libtpu: 0.0.40
codegen_flags: <defaults>
</compile_context>

<pallas_src>
import functools

import jax
import jax.numpy as jnp
from jax import lax
from jax.experimental import pallas as pl
from jax.experimental.pallas import tpu as pltpu

_LANE = 128


def _round_up(x, m):
    return (x + m - 1) // m * m


# --------------------------------------------------------------------------
# Kernel 1: batch-independent graph model (GAT-style over the label graph).
# --------------------------------------------------------------------------
def _graph_kernel(label_emb_ref, adj_ref, w_g_ref, out_ref, *, num_labels):
    """Writes a padded [L_pad, H] label matrix; rows >= num_labels are zero
    so the padded classifier logits are exactly zero (sliced off outside)."""
    f32 = jnp.float32
    h = jnp.dot(label_emb_ref[...], w_g_ref[...],
                preferred_element_type=f32)                       # [L, H]
    hidden = h.shape[-1]
    # scores = h @ h.T without an explicit transpose (contract last axes).
    scores = lax.dot_general(h, h, (((1,), (1,)), ((), ())),
                             preferred_element_type=f32) / float(hidden) ** 0.5
    scores = jnp.where(adj_ref[...] > 0.0, scores, -1e9)
    scores = scores - jnp.max(scores, axis=-1, keepdims=True)
    e = jnp.exp(scores)
    attn = e * pl.reciprocal(jnp.sum(e, axis=-1, keepdims=True), approx=True)
    label_mat = jnp.dot(attn, h, preferred_element_type=f32)      # [L, H]
    out_ref[...] = jnp.zeros_like(out_ref)
    out_ref[0:num_labels, :] = label_mat


# --------------------------------------------------------------------------
# Kernel 2: batch-gridded encoder (fused gather + pool) + VQ + classifier.
# --------------------------------------------------------------------------
def _encode_classify_kernel(
    ids_ref,        # [TB, S]    i32   token ids (batch tile)
    mask_ref,       # [TB, S]    f32   1.0 = valid token, 0.0 = pad
    emb_ref,        # [V, D]     bf16  embedding table (gather fused here)
    w_enc_ref,      # [D, H]     f32   encoder projection
    b_enc_ref,      # [1, H]     f32   encoder bias
    cb_ref,         # [K, H]     f32   VQ codebook (emb_t)
    label_mat_ref,  # [Lp, H]    f32   GAT output (zero-padded rows)
    z_t_ref,        # [TB, H]    f32   out: continuous latent
    z_q_ref,        # [TB, H]    f32   out: quantized latent
    idx_ref,        # [TB, 128]  i32   out: code index (broadcast over lanes)
    prob_ref,       # [TB, Lp]   f32   out: classifier probabilities (padded)
):
    f32 = jnp.float32
    ids = ids_ref[...]
    m = mask_ref[...]
    tb, seq = ids.shape
    vocab = emb_ref.shape[0]

    # ---- fused embedding gather + masked mean pool, routed through the MXU:
    #   counts[b, v] = sum_s mask[b, s] * 1{ids[b, s] == v}
    #   pooled[b, :] = counts[b, :] @ emb_table / sum_s mask[b, s]
    iota_v = lax.broadcasted_iota(jnp.int32, (tb, seq, vocab), 2)
    sel = jnp.where(iota_v == ids[:, :, None], m[:, :, None], 0.0)   # [TB,S,V]
    counts = jnp.sum(sel, axis=1)                                    # [TB,V]
    msum = jnp.sum(m, axis=-1, keepdims=True)                        # [TB,1]
    pooled = jnp.dot(counts.astype(jnp.bfloat16), emb_ref[...],
                     preferred_element_type=f32)                     # [TB,D]
    pooled = pooled / jnp.maximum(msum, 1.0)

    # ---- encoder projection -> continuous latent
    z_t = jnp.tanh(
        jnp.dot(pooled, w_enc_ref[...], preferred_element_type=f32)
        + b_enc_ref[...]
    )                                                                # [TB,H]
    z_t_ref[...] = z_t

    # ---- VQ: nearest-neighbour quantization
    cb = cb_ref[...]                                                 # [K,H]
    num_codes = cb.shape[0]
    cross = lax.dot_general(z_t, cb, (((1,), (1,)), ((), ())),
                            preferred_element_type=f32)              # [TB,K]
    d = (jnp.sum(z_t * z_t, axis=-1, keepdims=True)
         - 2.0 * cross
         + jnp.sum(cb * cb, axis=-1)[None, :])                       # [TB,K]
    min_d = jnp.min(d, axis=-1, keepdims=True)
    iota_k = lax.broadcasted_iota(jnp.int32, d.shape, 1)
    idx = jnp.min(jnp.where(d <= min_d, iota_k, num_codes),
                  axis=-1, keepdims=True)                            # [TB,1]
    idx_ref[...] = jnp.broadcast_to(idx, idx_ref.shape)
    onehot = (iota_k == idx).astype(f32)                             # [TB,K]
    z_q_ref[...] = jnp.dot(onehot, cb, preferred_element_type=f32)

    # ---- classifier: sigmoid(z_t @ label_matrix.T) (contract last axes)
    logits = lax.dot_general(z_t, label_mat_ref[...],
                             (((1,), (1,)), ((), ())),
                             preferred_element_type=f32)             # [TB,Lp]
    prob_ref[...] = jax.nn.sigmoid(logits)


def _vmem_spec():
    return pl.BlockSpec(memory_space=pltpu.MemorySpace.VMEM)


# --------------------------------------------------------------------------
# Wrapper
# --------------------------------------------------------------------------
@jax.jit
def semi_model_forward(input_idx, x_pad_mask, params):
    """Forward pass of Semi_Model.

    input_idx:  [B, S] int32 token ids
    x_pad_mask: [B, S] float32, 1.0 = valid token, 0.0 = padding
    """
    B, S = input_idx.shape
    V, D = params["emb_table"].shape
    H = params["w_enc"].shape[1]
    K = params["codebook"].shape[0]
    L = params["label_emb"].shape[0]

    # Batch tile: sublane-aligned (multiple of 8), capped at 128 so the
    # double-buffered input/output tiles stay far below the 32 MiB default
    # scoped VMEM (and v7x's 64 MiB physical VMEM).
    TB = min(128, _round_up(B, 8))
    B_pad = _round_up(B, TB)
    L_pad = _round_up(L, _LANE)   # lane-dense prob output
    IDX_PAD = _LANE               # lane-dense code-index output

    ids = input_idx.astype(jnp.int32)
    mask = x_pad_mask.astype(jnp.float32)
    if B_pad != B:
        ids = jnp.pad(ids, ((0, B_pad - B), (0, 0)))
        mask = jnp.pad(mask, ((0, B_pad - B), (0, 0)))

    # ---- graph model: batch-independent, hoisted out of the batch grid ----
    label_mat_pad = pl.pallas_call(
        functools.partial(_graph_kernel, num_labels=L),
        out_shape=jax.ShapeDtypeStruct((L_pad, H), jnp.float32),
        in_specs=[_vmem_spec(), _vmem_spec(), _vmem_spec()],
        out_specs=_vmem_spec(),
    )(params["label_emb"], params["adj_parent"], params["w_graph"])

    # ---- batch-gridded encoder + VQ + classifier ----
    emb_bf16 = params["emb_table"].astype(jnp.bfloat16)

    def batch_spec(shape):
        return pl.BlockSpec(shape, lambda i: (i, 0))

    def const_spec(shape):
        return pl.BlockSpec(shape, lambda i: (0, 0))

    flops = 2 * B_pad * (V * D + D * H + 2 * H * K + H * L_pad)
    transcendentals = B_pad * (H + L_pad)
    bytes_accessed = (
        B_pad * S * 8                                   # ids + mask
        + V * D * 2                                     # bf16 emb table
        + (D * H + H + K * H + L_pad * H) * 4           # weights
        + B_pad * (2 * H + IDX_PAD + L_pad) * 4         # outputs
    )

    z_t_p, z_q_p, idx_p, prob_p = pl.pallas_call(
        _encode_classify_kernel,
        out_shape=(
            jax.ShapeDtypeStruct((B_pad, H), jnp.float32),      # z_t
            jax.ShapeDtypeStruct((B_pad, H), jnp.float32),      # z_q
            jax.ShapeDtypeStruct((B_pad, IDX_PAD), jnp.int32),  # code indices
            jax.ShapeDtypeStruct((B_pad, L_pad), jnp.float32),  # prob (padded)
        ),
        grid=(B_pad // TB,),
        in_specs=[
            batch_spec((TB, S)),        # ids
            batch_spec((TB, S)),        # mask
            const_spec((V, D)),         # emb table (bf16)
            const_spec((D, H)),         # w_enc
            const_spec((1, H)),         # b_enc
            const_spec((K, H)),         # codebook
            const_spec((L_pad, H)),     # label matrix (padded)
        ],
        out_specs=(
            batch_spec((TB, H)),
            batch_spec((TB, H)),
            batch_spec((TB, IDX_PAD)),
            batch_spec((TB, L_pad)),
        ),
        compiler_params=pltpu.CompilerParams(
            dimension_semantics=("parallel",)),
        cost_estimate=pl.CostEstimate(
            flops=flops,
            transcendentals=transcendentals,
            bytes_accessed=bytes_accessed),
    )(ids, mask, emb_bf16, params["w_enc"], params["b_enc"],
      params["codebook"], label_mat_pad)

    return {
        "z_t": z_t_p[:B],
        "z_q": z_q_p[:B],
        "p_idx": idx_p[:B, :1],
        "label_matrix": label_mat_pad[:L],
        "prob": prob_p[:B, :L],
    }


def init_params(key, vocab=64, emb_dim=32, hidden=32, disper_num=8, num_labels=8):
    """Deterministic synthetic parameter init (shapes implied by the module)."""
    ks = jax.random.split(key, 6)
    scale = 0.1
    emb_table = scale * jax.random.normal(ks[0], (vocab, emb_dim), jnp.float32)
    w_enc = scale * jax.random.normal(ks[1], (emb_dim, hidden), jnp.float32)
    b_enc = jnp.zeros((1, hidden), jnp.float32)
    codebook = scale * jax.random.normal(ks[2], (disper_num, hidden), jnp.float32)
    label_emb = scale * jax.random.normal(ks[3], (num_labels, hidden), jnp.float32)
    w_graph = scale * jax.random.normal(ks[4], (hidden, hidden), jnp.float32)
    # adjacency: self-loops + a random sparse parent graph (deterministic)
    rand_adj = (jax.random.uniform(ks[5], (num_labels, num_labels)) < 0.3)
    adj_parent = (rand_adj | jnp.eye(num_labels, dtype=bool)).astype(jnp.float32)
    return {
        "emb_table": emb_table,
        "w_enc": w_enc,
        "b_enc": b_enc,
        "codebook": codebook,
        "label_emb": label_emb,
        "adj_parent": adj_parent,
        "w_graph": w_graph,
    }


if __name__ == "__main__":
    key = jax.random.PRNGKey(0)
    k_params, k_idx, k_mask = jax.random.split(key, 3)

    B, S, V = 2, 8, 64
    params = init_params(k_params, vocab=V, emb_dim=32, hidden=32,
                         disper_num=8, num_labels=8)

    input_idx = jax.random.randint(k_idx, (B, S), 0, V, dtype=jnp.int32)
    # last two positions of each sequence are padding
    x_pad_mask = jnp.concatenate(
        [jnp.ones((B, S - 2), jnp.float32), jnp.zeros((B, 2), jnp.float32)],
        axis=-1,
    )

    result = semi_model_forward(input_idx, x_pad_mask, params)
    jax.block_until_ready(result)

    assert result["z_t"].shape == (B, 32)
    assert result["z_q"].shape == (B, 32)
    assert result["p_idx"].shape == (B, 1)
    assert result["label_matrix"].shape == (8, 32)
    assert result["prob"].shape == (B, 8)
    assert bool(jnp.all((result["prob"] >= 0.0) & (result["prob"] <= 1.0)))

    print("KERNEL_OK")
</pallas_src>

<mosaic_0001>
module attributes {stable_mosaic.version = 11 : i64} {
  func.func @_graph_kernel(%arg0: memref<8x32xf32, #tpu.memory_space<vmem>>, %arg1: memref<8x8xf32, #tpu.memory_space<vmem>>, %arg2: memref<32x32xf32, #tpu.memory_space<vmem>>, %arg3: memref<128x32xf32, #tpu.memory_space<vmem>>) attributes {dimension_semantics = [], scalar_prefetch = 0 : i64, scratch_operands = 0 : i64, tpu.core_type = #tpu.core_type<tc>} {
    %c0 = arith.constant 0 : index
    %c0_0 = arith.constant 0 : index
    %0 = vector.load %arg0[%c0, %c0_0] : memref<8x32xf32, #tpu.memory_space<vmem>>, vector<8x32xf32>
    %c0_1 = arith.constant 0 : index
    %c0_2 = arith.constant 0 : index
    %1 = vector.load %arg2[%c0_1, %c0_2] : memref<32x32xf32, #tpu.memory_space<vmem>>, vector<32x32xf32>
    %cst = arith.constant dense<0.000000e+00> : vector<8x32xf32>
    %2 = tpu.matmul %0, %1, %cst {dimension_numbers = #tpu.dot_dimension_numbers<[1], [0], [0], [1], [0, 0, 1, 1], [], []>} : vector<8x32xf32>, vector<32x32xf32>, vector<8x32xf32> -> vector<8x32xf32>
    %cst_3 = arith.constant dense<0.000000e+00> : vector<8x8xf32>
    %3 = tpu.matmul %2, %2, %cst_3 {dimension_numbers = #tpu.dot_dimension_numbers<[1], [1], [0], [0], [0, 0, 1, 0], [], []>} : vector<8x32xf32>, vector<8x32xf32>, vector<8x8xf32> -> vector<8x8xf32>
    %cst_4 = arith.constant 5.65685415 : f32
    %4 = vector.broadcast %cst_4 : f32 to vector<8x8xf32>
    %5 = arith.divf %3, %4 : vector<8x8xf32>
    %c0_5 = arith.constant 0 : index
    %c0_6 = arith.constant 0 : index
    %6 = vector.load %arg1[%c0_5, %c0_6] : memref<8x8xf32, #tpu.memory_space<vmem>>, vector<8x8xf32>
    %cst_7 = arith.constant 0.000000e+00 : f32
    %7 = vector.broadcast %cst_7 : f32 to vector<8x8xf32>
    %8 = arith.cmpf ogt, %6, %7 : vector<8x8xf32>
    %cst_8 = arith.constant -1.000000e+09 : f32
    %9 = vector.broadcast %cst_8 : f32 to vector<8x8xf32>
    %10 = arith.select %8, %5, %9 : vector<8x8xi1>, vector<8x8xf32>
    %cst_9 = arith.constant dense<0xFF800000> : vector<8xf32>
    %11 = vector.multi_reduction <maximumf>, %10, %cst_9 [1] : vector<8x8xf32> to vector<8xf32>
    %12 = vector.shape_cast %11 : vector<8xf32> to vector<8x1xf32>
    %13 = vector.broadcast %12 : vector<8x1xf32> to vector<8x8xf32>
    %14 = arith.subf %10, %13 : vector<8x8xf32>
    %15 = math.exp %14 : vector<8x8xf32>
    %cst_10 = arith.constant dense<0.000000e+00> : vector<8xf32>
    %16 = vector.multi_reduction <add>, %15, %cst_10 [1] : vector<8x8xf32> to vector<8xf32>
    %17 = vector.shape_cast %16 : vector<8xf32> to vector<8x1xf32>
    %18 = tpu.reciprocal %17 {approx = true} : vector<8x1xf32> -> vector<8x1xf32>
    %19 = vector.broadcast %18 : vector<8x1xf32> to vector<8x8xf32>
    %20 = arith.mulf %15, %19 : vector<8x8xf32>
    %cst_11 = arith.constant dense<0.000000e+00> : vector<8x32xf32>
    %21 = tpu.matmul %20, %2, %cst_11 {dimension_numbers = #tpu.dot_dimension_numbers<[1], [0], [0], [1], [0, 0, 1, 1], [], []>} : vector<8x8xf32>, vector<8x32xf32>, vector<8x32xf32> -> vector<8x32xf32>
    %cst_12 = arith.constant 0.000000e+00 : f32
    %22 = vector.broadcast %cst_12 : f32 to vector<128x32xf32>
    %c0_13 = arith.constant 0 : index
    %c0_14 = arith.constant 0 : index
    %23 = vector.load %arg3[%c0_13, %c0_14] : memref<128x32xf32, #tpu.memory_space<vmem>>, vector<128x32xf32>
    tpu.vector_store %arg3[%c0_13, %c0_14], %22 {strides = array<i32>} : memref<128x32xf32, #tpu.memory_space<vmem>>, vector<128x32xf32>,
    %c0_15 = arith.constant 0 : index
    %c0_16 = arith.constant 0 : index
    %24 = vector.load %arg3[%c0_15, %c0_16] : memref<128x32xf32, #tpu.memory_space<vmem>>, vector<8x32xf32>
    tpu.vector_store %arg3[%c0_15, %c0_16], %21 {strides = array<i32>} : memref<128x32xf32, #tpu.memory_space<vmem>>, vector<8x32xf32>,
    return
  }
}

module attributes {stable_mosaic.version = 11 : i64} {
  func.func @_encode_classify_kernel(%arg0: i32, %arg1: memref<8x8xi32, #tpu.memory_space<vmem>>, %arg2: memref<8x8xf32, #tpu.memory_space<vmem>>, %arg3: memref<64x32xbf16, #tpu.memory_space<vmem>>, %arg4: memref<32x32xf32, #tpu.memory_space<vmem>>, %arg5: memref<1x32xf32, #tpu.memory_space<vmem>>, %arg6: memref<8x32xf32, #tpu.memory_space<vmem>>, %arg7: memref<128x32xf32, #tpu.memory_space<vmem>>, %arg8: memref<8x32xf32, #tpu.memory_space<vmem>>, %arg9: memref<8x32xf32, #tpu.memory_space<vmem>>, %arg10: memref<8x128xi32, #tpu.memory_space<vmem>>, %arg11: memref<8x128xf32, #tpu.memory_space<vmem>>) attributes {dimension_semantics = [#tpu.dimension_semantics<parallel>], iteration_bounds = array<i64: 1>, scalar_prefetch = 0 : i64, scratch_operands = 0 : i64, tpu.core_type = #tpu.core_type<tc>, window_params = [{transform_indices = @transform_0, window_bounds = array<i64: 8, 8>}, {transform_indices = @transform_1, window_bounds = array<i64: 8, 8>}, {pipeline_mode = #tpu.pipeline_mode<synchronous>, transform_indices = @transform_2, window_bounds = array<i64: 64, 32>}, {pipeline_mode = #tpu.pipeline_mode<synchronous>, transform_indices = @transform_3, window_bounds = array<i64: 32, 32>}, {pipeline_mode = #tpu.pipeline_mode<synchronous>, transform_indices = @transform_4, window_bounds = array<i64: 1, 32>}, {pipeline_mode = #tpu.pipeline_mode<synchronous>, transform_indices = @transform_5, window_bounds = array<i64: 8, 32>}, {pipeline_mode = #tpu.pipeline_mode<synchronous>, transform_indices = @transform_6, window_bounds = array<i64: 128, 32>}, {transform_indices = @transform_7, window_bounds = array<i64: 8, 32>}, {transform_indices = @transform_8, window_bounds = array<i64: 8, 32>}, {transform_indices = @transform_9, window_bounds = array<i64: 8, 128>}, {transform_indices = @transform_10, window_bounds = array<i64: 8, 128>}]} {
    %c0 = arith.constant 0 : index
    %c0_0 = arith.constant 0 : index
    %0 = vector.load %arg1[%c0, %c0_0] : memref<8x8xi32, #tpu.memory_space<vmem>>, vector<8x8xi32>
    %c0_1 = arith.constant 0 : index
    %c0_2 = arith.constant 0 : index
    %1 = vector.load %arg2[%c0_1, %c0_2] : memref<8x8xf32, #tpu.memory_space<vmem>>, vector<8x8xf32>
    %2 = tpu.iota {dimensions = array<i32: 2>} : vector<8x8x64xi32>
    %3 = vector.shape_cast %0 : vector<8x8xi32> to vector<8x8x1xi32>
    %4 = vector.broadcast %3 : vector<8x8x1xi32> to vector<8x8x64xi32>
    %5 = arith.cmpi eq, %2, %4 : vector<8x8x64xi32>
    %6 = vector.shape_cast %1 : vector<8x8xf32> to vector<8x8x1xf32>
    %cst = arith.constant 0.000000e+00 : f32
    %7 = vector.shape_cast %6 : vector<8x8x1xf32> to vector<8x8x1xf32>
    %8 = vector.broadcast %7 : vector<8x8x1xf32> to vector<8x8x64xf32>
    %9 = vector.broadcast %cst : f32 to vector<8x8x64xf32>
    %10 = arith.select %5, %8, %9 : vector<8x8x64xi1>, vector<8x8x64xf32>
    %cst_3 = arith.constant dense<0.000000e+00> : vector<8x64xf32>
    %11 = vector.multi_reduction <add>, %10, %cst_3 [1] : vector<8x8x64xf32> to vector<8x64xf32>
    %cst_4 = arith.constant dense<0.000000e+00> : vector<8xf32>
    %12 = vector.multi_reduction <add>, %1, %cst_4 [1] : vector<8x8xf32> to vector<8xf32>
    %13 = vector.shape_cast %12 : vector<8xf32> to vector<8x1xf32>
    %14 = arith.truncf %11 : vector<8x64xf32> to vector<8x64xbf16>
    %c0_5 = arith.constant 0 : index
    %c0_6 = arith.constant 0 : index
    %15 = vector.load %arg3[%c0_5, %c0_6] : memref<64x32xbf16, #tpu.memory_space<vmem>>, vector<64x32xbf16>
    %cst_7 = arith.constant dense<0.000000e+00> : vector<8x32xf32>
    %16 = tpu.matmul %14, %15, %cst_7 {dimension_numbers = #tpu.dot_dimension_numbers<[1], [0], [0], [1], [0, 0, 1, 1], [], []>} : vector<8x64xbf16>, vector<64x32xbf16>, vector<8x32xf32> -> vector<8x32xf32>
    %cst_8 = arith.constant 1.000000e+00 : f32
    %17 = vector.broadcast %cst_8 : f32 to vector<8x1xf32>
    %18 = arith.maximumf %13, %17 : vector<8x1xf32>
    %19 = vector.broadcast %18 : vector<8x1xf32> to vector<8x32xf32>
    %20 = arith.divf %16, %19 : vector<8x32xf32>
    %c0_9 = arith.constant 0 : index
    %c0_10 = arith.constant 0 : index
    %21 = vector.load %arg4[%c0_9, %c0_10] : memref<32x32xf32, #tpu.memory_space<vmem>>, vector<32x32xf32>
    %cst_11 = arith.constant dense<0.000000e+00> : vector<8x32xf32>
    %22 = tpu.matmul %20, %21, %cst_11 {dimension_numbers = #tpu.dot_dimension_numbers<[1], [0], [0], [1], [0, 0, 1, 1], [], []>} : vector<8x32xf32>, vector<32x32xf32>, vector<8x32xf32> -> vector<8x32xf32>
    %c0_12 = arith.constant 0 : index
    %c0_13 = arith.constant 0 : index
    %23 = vector.load %arg5[%c0_12, %c0_13] : memref<1x32xf32, #tpu.memory_space<vmem>>, vector<1x32xf32>
    %24 = vector.broadcast %23 : vector<1x32xf32> to vector<8x32xf32>
    %25 = arith.addf %22, %24 : vector<8x32xf32>
    %26 = math.tanh %25 : vector<8x32xf32>
    %c0_14 = arith.constant 0 : index
    %c0_15 = arith.constant 0 : index
    %27 = vector.load %arg8[%c0_14, %c0_15] : memref<8x32xf32, #tpu.memory_space<vmem>>, vector<8x32xf32>
    tpu.vector_store %arg8[%c0_14, %c0_15], %26 {strides = array<i32>} : memref<8x32xf32, #tpu.memory_space<vmem>>, vector<8x32xf32>,
    %c0_16 = arith.constant 0 : index
    %c0_17 = arith.constant 0 : index
    %28 = vector.load %arg6[%c0_16, %c0_17] : memref<8x32xf32, #tpu.memory_space<vmem>>, vector<8x32xf32>
    %cst_18 = arith.constant dense<0.000000e+00> : vector<8x8xf32>
    %29 = tpu.matmul %26, %28, %cst_18 {dimension_numbers = #tpu.dot_dimension_numbers<[1], [1], [0], [0], [0, 0, 1, 0], [], []>} : vector<8x32xf32>, vector<8x32xf32>, vector<8x8xf32> -> vector<8x8xf32>
    %30 = arith.mulf %26, %26 : vector<8x32xf32>
    %cst_19 = arith.constant dense<0.000000e+00> : vector<8xf32>
    %31 = vector.multi_reduction <add>, %30, %cst_19 [1] : vector<8x32xf32> to vector<8xf32>
    %32 = vector.shape_cast %31 : vector<8xf32> to vector<8x1xf32>
    %cst_20 = arith.constant 2.000000e+00 : f32
    %33 = vector.broadcast %cst_20 : f32 to vector<8x8xf32>
    %34 = arith.mulf %33, %29 : vector<8x8xf32>
    %35 = vector.broadcast %32 : vector<8x1xf32> to vector<8x8xf32>
    %36 = arith.subf %35, %34 : vector<8x8xf32>
    %37 = arith.mulf %28, %28 : vector<8x32xf32>
    %cst_21 = arith.constant dense<0.000000e+00> : vector<8xf32>
    %38 = vector.multi_reduction <add>, %37, %cst_21 [1] : vector<8x32xf32> to vector<8xf32>
    %39 = vector.shape_cast %38 : vector<8xf32> to vector<1x8xf32>
    %40 = vector.broadcast %39 : vector<1x8xf32> to vector<8x8xf32>
    %41 = arith.addf %36, %40 : vector<8x8xf32>
    %cst_22 = arith.constant dense<0x7F800000> : vector<8xf32>
    %42 = vector.multi_reduction <minimumf>, %41, %cst_22 [1] : vector<8x8xf32> to vector<8xf32>
    %43 = vector.shape_cast %42 : vector<8xf32> to vector<8x1xf32>
    %44 = tpu.iota {dimensions = array<i32: 1>} : vector<8x8xi32>
    %45 = vector.broadcast %43 : vector<8x1xf32> to vector<8x8xf32>
    %46 = arith.cmpf ole, %41, %45 : vector<8x8xf32>
    %c8_i32 = arith.constant 8 : i32
    %47 = vector.broadcast %c8_i32 : i32 to vector<8x8xi32>
    %48 = arith.select %46, %44, %47 : vector<8x8xi1>, vector<8x8xi32>
    %cst_23 = arith.constant dense<2147483647> : vector<8xi32>
    %49 = vector.multi_reduction <minsi>, %48, %cst_23 [1] : vector<8x8xi32> to vector<8xi32>
    %50 = vector.shape_cast %49 : vector<8xi32> to vector<8x1xi32>
    %51 = vector.shape_cast %50 : vector<8x1xi32> to vector<8x1xi32>
    %52 = vector.broadcast %51 : vector<8x1xi32> to vector<8x128xi32>
    %c0_24 = arith.constant 0 : index
    %c0_25 = arith.constant 0 : index
    %53 = vector.load %arg10[%c0_24, %c0_25] : memref<8x128xi32, #tpu.memory_space<vmem>>, vector<8x128xi32>
    tpu.vector_store %arg10[%c0_24, %c0_25], %52 {strides = array<i32>} : memref<8x128xi32, #tpu.memory_space<vmem>>, vector<8x128xi32>,
    %54 = vector.broadcast %50 : vector<8x1xi32> to vector<8x8xi32>
    %55 = arith.cmpi eq, %44, %54 : vector<8x8xi32>
    %56 = arith.extui %55 : vector<8x8xi1> to vector<8x8xi32>
    %57 = arith.sitofp %56 : vector<8x8xi32> to vector<8x8xf32>
    %cst_26 = arith.constant dense<0.000000e+00> : vector<8x32xf32>
    %58 = tpu.matmul %57, %28, %cst_26 {dimension_numbers = #tpu.dot_dimension_numbers<[1], [0], [0], [1], [0, 0, 1, 1], [], []>} : vector<8x8xf32>, vector<8x32xf32>, vector<8x32xf32> -> vector<8x32xf32>
    %c0_27 = arith.constant 0 : index
    %c0_28 = arith.constant 0 : index
    %59 = vector.load %arg9[%c0_27, %c0_28] : memref<8x32xf32, #tpu.memory_space<vmem>>, vector<8x32xf32>
    tpu.vector_store %arg9[%c0_27, %c0_28], %58 {strides = array<i32>} : memref<8x32xf32, #tpu.memory_space<vmem>>, vector<8x32xf32>,
    %c0_29 = arith.constant 0 : index
    %c0_30 = arith.constant 0 : index
    %60 = vector.load %arg7[%c0_29, %c0_30] : memref<128x32xf32, #tpu.memory_space<vmem>>, vector<128x32xf32>
    %cst_31 = arith.constant dense<0.000000e+00> : vector<8x128xf32>
    %61 = tpu.matmul %26, %60, %cst_31 {dimension_numbers = #tpu.dot_dimension_numbers<[1], [1], [0], [0], [0, 0, 1, 0], [], []>} : vector<8x32xf32>, vector<128x32xf32>, vector<8x128xf32> -> vector<8x128xf32>
    %62 = arith.negf %61 : vector<8x128xf32>
    %63 = math.exp %62 : vector<8x128xf32>
    %cst_32 = arith.constant 1.000000e+00 : f32
    %64 = vector.broadcast %cst_32 : f32 to vector<8x128xf32>
    %65 = arith.addf %64, %63 : vector<8x128xf32>
    %66 = arith.divf %64, %65 : vector<8x128xf32>
    %c0_33 = arith.constant 0 : index
    %c0_34 = arith.constant 0 : index
    %67 = vector.load %arg11[%c0_33, %c0_34] : memref<8x128xf32, #tpu.memory_space<vmem>>, vector<8x128xf32>
    tpu.vector_store %arg11[%c0_33, %c0_34], %66 {strides = array<i32>} : memref<8x128xf32, #tpu.memory_space<vmem>>, vector<8x128xf32>,
    return
  }
  func.func @transform_0(%arg0: i32) -> (i32, i32) {
    %c0_i32 = arith.constant 0 : i32
    %c0_i32_0 = arith.constant 0 : i32
    return %arg0, %c0_i32 : i32, i32
  }
  func.func @transform_1(%arg0: i32) -> (i32, i32) {
    %c0_i32 = arith.constant 0 : i32
    %c0_i32_0 = arith.constant 0 : i32
    return %arg0, %c0_i32 : i32, i32
  }
  func.func @transform_2(%arg0: i32) -> (i32, i32) {
    %c0_i32 = arith.constant 0 : i32
    %c0_i32_0 = arith.constant 0 : i32
    %c0_i32_1 = arith.constant 0 : i32
    return %c0_i32, %c0_i32_0 : i32, i32
  }
  func.func @transform_3(%arg0: i32) -> (i32, i32) {
    %c0_i32 = arith.constant 0 : i32
    %c0_i32_0 = arith.constant 0 : i32
    %c0_i32_1 = arith.constant 0 : i32
    return %c0_i32, %c0_i32_0 : i32, i32
  }
  func.func @transform_4(%arg0: i32) -> (i32, i32) {
    %c0_i32 = arith.constant 0 : i32
    %c0_i32_0 = arith.constant 0 : i32
    %c0_i32_1 = arith.constant 0 : i32
    return %c0_i32, %c0_i32_0 : i32, i32
  }
  func.func @transform_5(%arg0: i32) -> (i32, i32) {
    %c0_i32 = arith.constant 0 : i32
    %c0_i32_0 = arith.constant 0 : i32
    %c0_i32_1 = arith.constant 0 : i32
    return %c0_i32, %c0_i32_0 : i32, i32
  }
  func.func @transform_6(%arg0: i32) -> (i32, i32) {
    %c0_i32 = arith.constant 0 : i32
    %c0_i32_0 = arith.constant 0 : i32
    %c0_i32_1 = arith.constant 0 : i32
    return %c0_i32, %c0_i32_0 : i32, i32
  }
  func.func @transform_7(%arg0: i32) -> (i32, i32) {
    %c0_i32 = arith.constant 0 : i32
    %c0_i32_0 = arith.constant 0 : i32
    return %arg0, %c0_i32 : i32, i32
  }
  func.func @transform_8(%arg0: i32) -> (i32, i32) {
    %c0_i32 = arith.constant 0 : i32
    %c0_i32_0 = arith.constant 0 : i32
    return %arg0, %c0_i32 : i32, i32
  }
  func.func @transform_9(%arg0: i32) -> (i32, i32) {
    %c0_i32 = arith.constant 0 : i32
    %c0_i32_0 = arith.constant 0 : i32
    return %arg0, %c0_i32 : i32, i32
  }
  func.func @transform_10(%arg0: i32) -> (i32, i32) {
    %c0_i32 = arith.constant 0 : i32
    %c0_i32_0 = arith.constant 0 : i32
    return %arg0, %c0_i32 : i32, i32
  }
}

</mosaic_0001>

<llo_original>
// kernel: semi_model_forward.2
$region0: #{semi_model_forward.2}
  #allocation0 [shape = 'u32[]', space=smem, size = 0x4, offset = 0x4, fixed_abs, tag = 'smem constant byte address 0x4 - core index']
  #allocation1 [shape = 'u32[144,128]{1,0:T(1,128)}', space=vmem, size = 0x12000, scoped, tag = 'internal scratch']
  %s0 = inlined_call_operand.vmem [shape: f32[8,32], index: 0, kind: input, shape index: {}]
  %s1 = inlined_call_operand.vmem [shape: f32[8,8], index: 1, kind: input, shape index: {}]
  %s2 = inlined_call_operand.vmem [shape: f32[32,32], index: 2, kind: input, shape index: {}]
  %s3 = inlined_call_operand.vmem [shape: f32[128,32], index: 3, kind: output, shape index: {}]
  %s4 = sld [smem:[#allocation0]]
  $region22: #{semi_model_forward.2} parent=0
    _
  %s6 = ssub.s32 1, %s4
  %s7 = scalar_select 0, %s6, %s4
  // Predicated region
  $region2: #{semi_model_forward.2} parent=0 // pred_check
    _
  $region3: #{semi_model_forward.2} parent=0 // pred_check_branch
    %9 = sbr.rel (0) target = $region5
  $region4: #{semi_model_forward.2} parent=0 // pred_region
    _
  $region5: #{semi_model_forward.2} parent=0 // pred_fallthru
    _
  // Predicated region
  $region6: #{semi_model_forward.2} parent=0 // pred_check
    _
  $region7: #{semi_model_forward.2} parent=0 // pred_check_branch
    %11 = sbr.rel (0) target = $region9
  $region8: #{semi_model_forward.2} parent=0 // pred_region
    _
  $region9: #{semi_model_forward.2} parent=0 // pred_fallthru
    _
  // Predicated region
  $region10: #{semi_model_forward.2} parent=0 // pred_check
    _
  $region11: #{semi_model_forward.2} parent=0 // pred_check_branch
    %13 = sbr.rel (0) target = $region13
  $region12: #{semi_model_forward.2} parent=0 // pred_region
    _
  $region13: #{semi_model_forward.2} parent=0 // pred_fallthru
    _
  %v14 = vld [vmem:[%s0] sm:$0xff]
  %v15 = vld [vmem:[%s2] sm:$0xff]
  %v16 = vld [vmem:[%s2 + $0x8] sm:$0xff]
  %v17 = vld [vmem:[%s2 + $0x10] sm:$0xff]
  %v18 = vld [vmem:[%s2 + $0x18] sm:$0xff]
  %vm19 = vcmask 261120
  %v21 = vsel %vm19, %v14, 0
  %23 = vmatprep.subr.mxu0 0.0
  %24 = vmatpush1.msra.mxu0 0.0
  %25 = vmatprep.subr.mxu0 0.0
  %26 = vmatpush1.msra.mxu0 0.0
  %27 = vmatprep.subr.mxu0 0.0
  %28 = vmatpush1.msra.mxu0 0.0
  %29 = vmatprep.subr.mxu0 0.0
  %30 = vmatpush1.msra.mxu0 0.0
  %31 = vmatprep.subr.mxu0 0.0
  %32 = vmatpush1.msra.mxu0 0.0
  %33 = vmatprep.subr.mxu0 0.0
  %34 = vmatpush1.msra.mxu0 0.0
  %35 = vmatprep.subr.mxu0 0.0
  %36 = vmatpush1.msra.mxu0 0.0
  %37 = vmatprep.subr.mxu0 0.0
  %38 = vmatpush1.msra.mxu0 0.0
  %39 = vmatprep.subr.mxu0 0.0
  %40 = vmatpush1.msra.mxu0 0.0
  %41 = vmatprep.subr.mxu0 0.0
  %42 = vmatpush1.msra.mxu0 0.0
  %43 = vmatprep.subr.mxu0 0.0
  %44 = vmatpush1.msra.mxu0 0.0
  %45 = vmatprep.subr.mxu0 0.0
  %46 = vmatpush1.msra.mxu0 0.0
  %47 = vmatprep.subr.mxu0 0.0
  %48 = vmatpush1.msra.mxu0 %v18
  %49 = vmatprep.subr.mxu0 0.0
  %50 = vmatpush1.msra.mxu0 %v17
  %51 = vmatprep.subr.mxu0 0.0
  %52 = vmatpush1.msra.mxu0 %v16
  %53 = vmatprep.subr.mxu0 0.0
  %54 = vmatpush1.msra.mxu0 %v15
  %55 = vmatprep.subr.mxu0 0.0
  %56 = vmatpush2.msra.mxu0 0.0
  %57 = vmatprep.subr.mxu0 0.0
  %58 = vmatpush2.msra.mxu0 0.0
  %59 = vmatprep.subr.mxu0 0.0
  %60 = vmatpush2.msra.mxu0 0.0
  %61 = vmatprep.subr.mxu0 0.0
  %62 = vmatpush2.msra.mxu0 0.0
  %63 = vmatprep.subr.mxu0 0.0
  %64 = vmatpush2.msra.mxu0 0.0
  %65 = vmatprep.subr.mxu0 0.0
  %66 = vmatpush2.msra.mxu0 0.0
  %67 = vmatprep.subr.mxu0 0.0
  %68 = vmatpush2.msra.mxu0 0.0
  %69 = vmatprep.subr.mxu0 0.0
  %70 = vmatpush2.msra.mxu0 0.0
  %71 = vmatprep.subr.mxu0 0.0
  %72 = vmatpush2.msra.mxu0 0.0
  %73 = vmatprep.subr.mxu0 0.0
  %74 = vmatpush2.msra.mxu0 0.0
  %75 = vmatprep.subr.mxu0 0.0
  %76 = vmatpush2.msra.mxu0 0.0
  %77 = vmatprep.subr.mxu0 0.0
  %78 = vmatpush2.msra.mxu0 0.0
  %79 = vmatprep.subr.mxu0 0.0
  %80 = vmatpush2.msra.mxu0 0.0
  %81 = vmatprep.subr.mxu0 0.0
  %82 = vmatpush2.msra.mxu0 0.0
  %83 = vmatprep.subr.mxu0 0.0
  %84 = vmatpush2.msra.mxu0 0.0
  %85 = vmatprep.subr.mxu0 0.0
  %86 = vmatpush2.msra.mxu0 0.0
  %87 = vmatprep.mubr.f32.mxu0 0.0
  %88 = vmatmul.mubr.f32.gmra.mxu0 %v21
  %v89 = vpop.f32.mrf.mxu0
  %v90 = vadd.f32 0.0, %v89
  %v91 = vpop.f32.mrf.mxu0
  %92 = vdwg.mxu0
  %v94 = vsel %vm19, %v90, 0
  %96 = vmatprep.subr.mxu0 0.0
  %97 = vmatpush1.xpose.msra.mxu0 0.0
  %98 = vmatprep.subr.mxu0 0.0
  %99 = vmatpush1.xpose.msra.mxu0 0.0
  %100 = vmatprep.subr.mxu0 0.0
  %101 = vmatpush1.xpose.msra.mxu0 0.0
  %102 = vmatprep.subr.mxu0 0.0
  %103 = vmatpush1.xpose.msra.mxu0 0.0
  %104 = vmatprep.subr.mxu0 0.0
  %105 = vmatpush1.xpose.msra.mxu0 0.0
  %106 = vmatprep.subr.mxu0 0.0
  %107 = vmatpush1.xpose.msra.mxu0 0.0
  %108 = vmatprep.subr.mxu0 0.0
  %109 = vmatpush1.xpose.msra.mxu0 0.0
  %110 = vmatprep.subr.mxu0 0.0
  %111 = vmatpush1.xpose.msra.mxu0 0.0
  %112 = vmatprep.subr.mxu0 0.0
  %113 = vmatpush1.xpose.msra.mxu0 0.0
  %114 = vmatprep.subr.mxu0 0.0
  %115 = vmatpush1.xpose.msra.mxu0 0.0
  %116 = vmatprep.subr.mxu0 0.0
  %117 = vmatpush1.xpose.msra.mxu0 0.0
  %118 = vmatprep.subr.mxu0 0.0
  %119 = vmatpush1.xpose.msra.mxu0 0.0
  %120 = vmatprep.subr.mxu0 0.0
  %121 = vmatpush1.xpose.msra.mxu0 0.0
  %122 = vmatprep.subr.mxu0 0.0
  %123 = vmatpush1.xpose.msra.mxu0 0.0
  %124 = vmatprep.subr.mxu0 0.0
  %125 = vmatpush1.xpose.msra.mxu0 0.0
  %126 = vmatprep.subr.mxu0 0.0
  %127 = vmatpush1.xpose.msra.mxu0 %v94
  %128 = vmatprep.subr.mxu0 0.0
  %129 = vmatpush2.xpose.msra.mxu0 0.0
  %130 = vmatprep.subr.mxu0 0.0
  %131 = vmatpush2.xpose.msra.mxu0 0.0
  %132 = vmatprep.subr.mxu0 0.0
  %133 = vmatpush2.xpose.msra.mxu0 0.0
  %134 = vmatprep.subr.mxu0 0.0
  %135 = vmatpush2.xpose.msra.mxu0 0.0
  %136 = vmatprep.subr.mxu0 0.0
  %137 = vmatpush2.xpose.msra.mxu0 0.0
  %138 = vmatprep.subr.mxu0 0.0
  %139 = vmatpush2.xpose.msra.mxu0 0.0
  %140 = vmatprep.subr.mxu0 0.0
  %141 = vmatpush2.xpose.msra.mxu0 0.0
  %142 = vmatprep.subr.mxu0 0.0
  %143 = vmatpush2.xpose.msra.mxu0 0.0
  %144 = vmatprep.subr.mxu0 0.0
  %145 = vmatpush2.xpose.msra.mxu0 0.0
  %146 = vmatprep.subr.mxu0 0.0
  %147 = vmatpush2.xpose.msra.mxu0 0.0
  %148 = vmatprep.subr.mxu0 0.0
  %149 = vmatpush2.xpose.msra.mxu0 0.0
  %150 = vmatprep.subr.mxu0 0.0
  %151 = vmatpush2.xpose.msra.mxu0 0.0
  %152 = vmatprep.subr.mxu0 0.0
  %153 = vmatpush2.xpose.msra.mxu0 0.0
  %154 = vmatprep.subr.mxu0 0.0
  %155 = vmatpush2.xpose.msra.mxu0 0.0
  %156 = vmatprep.subr.mxu0 0.0
  %157 = vmatpush2.xpose.msra.mxu0 0.0
  %158 = vmatprep.subr.mxu0 0.0
  %159 = vmatpush2.xpose.msra.mxu0 0.0
  %160 = vmatprep.mubr.f32.mxu0 0.0
  %161 = vmatmul.mubr.f32.gmra.mxu0 %v94
  %v162 = vpop.f32.mrf.mxu0
  %v163 = vadd.f32 0.0, %v162
  %v164 = vpop.f32.mrf.mxu0
  %165 = vdwg.mxu0
  %v166 = vrcp.pop 5.656854
  %v167 = vmul.f32 %v163, %v166
  %v168 = vld [vmem:[%s1] sm:$0xff]
  %vm169 = vcmp.gt.f32.partialorder %v168, 0.0
  %v170 = vsel %vm169, %v167, -1e+09
  %vm171 = vcmask 64512
  %v172 = vsel %vm171, %v170, -inf
  %173 = vmax.xlane.f32.xlu0 %v172
  %v174 = vpop.xlane.xlu0 %173
  %v175 = vsub.f32 %v170, %v174
  %v176 = vmul.f32 %v175, 1.442695
  %v177 = vpow.pop %v176
  %v178 = vsel %vm171, %v177, 0.0
  %179 = vadd.xlane.f32.xlu0 %v178
  %v180 = vpop.xlane.xlu0 %179
  %v181 = vrcp.pop %v180
  %v182 = vmul.f32 %v177, %v181
  %v184 = vsel %vm171, %v182, 0
  %186 = vmatprep.subr.mxu0 0.0
  %187 = vmatpush1.msra.mxu0 0.0
  %188 = vmatprep.subr.mxu0 0.0
  %189 = vmatpush1.msra.mxu0 0.0
  %190 = vmatprep.subr.mxu0 0.0
  %191 = vmatpush1.msra.mxu0 0.0
  %192 = vmatprep.subr.mxu0 0.0
  %193 = vmatpush1.msra.mxu0 0.0
  %194 = vmatprep.subr.mxu0 0.0
  %195 = vmatpush1.msra.mxu0 0.0
  %196 = vmatprep.subr.mxu0 0.0
  %197 = vmatpush1.msra.mxu0 0.0
  %198 = vmatprep.subr.mxu0 0.0
  %199 = vmatpush1.msra.mxu0 0.0
  %200 = vmatprep.subr.mxu0 0.0
  %201 = vmatpush1.msra.mxu0 0.0
  %202 = vmatprep.subr.mxu0 0.0
  %203 = vmatpush1.msra.mxu0 0.0
  %204 = vmatprep.subr.mxu0 0.0
  %205 = vmatpush1.msra.mxu0 0.0
  %206 = vmatprep.subr.mxu0 0.0
  %207 = vmatpush1.msra.mxu0 0.0
  %208 = vmatprep.subr.mxu0 0.0
  %209 = vmatpush1.msra.mxu0 0.0
  %210 = vmatprep.subr.mxu0 0.0
  %211 = vmatpush1.msra.mxu0 0.0
  %212 = vmatprep.subr.mxu0 0.0
  %213 = vmatpush1.msra.mxu0 0.0
  %214 = vmatprep.subr.mxu0 0.0
  %215 = vmatpush1.msra.mxu0 0.0
  %216 = vmatprep.subr.mxu0 0.0
  %217 = vmatpush1.msra.mxu0 %v90
  %218 = vmatprep.subr.mxu0 0.0
  %219 = vmatpush2.msra.mxu0 0.0
  %220 = vmatprep.subr.mxu0 0.0
  %221 = vmatpush2.msra.mxu0 0.0
  %222 = vmatprep.subr.mxu0 0.0
  %223 = vmatpush2.msra.mxu0 0.0
  %224 = vmatprep.subr.mxu0 0.0
  %225 = vmatpush2.msra.mxu0 0.0
  %226 = vmatprep.subr.mxu0 0.0
  %227 = vmatpush2.msra.mxu0 0.0
  %228 = vmatprep.subr.mxu0 0.0
  %229 = vmatpush2.msra.mxu0 0.0
  %230 = vmatprep.subr.mxu0 0.0
  %231 = vmatpush2.msra.mxu0 0.0
  %232 = vmatprep.subr.mxu0 0.0
  %233 = vmatpush2.msra.mxu0 0.0
  %234 = vmatprep.subr.mxu0 0.0
  %235 = vmatpush2.msra.mxu0 0.0
  %236 = vmatprep.subr.mxu0 0.0
  %237 = vmatpush2.msra.mxu0 0.0
  %238 = vmatprep.subr.mxu0 0.0
  %239 = vmatpush2.msra.mxu0 0.0
  %240 = vmatprep.subr.mxu0 0.0
  %241 = vmatpush2.msra.mxu0 0.0
  %242 = vmatprep.subr.mxu0 0.0
  %243 = vmatpush2.msra.mxu0 0.0
  %244 = vmatprep.subr.mxu0 0.0
  %245 = vmatpush2.msra.mxu0 0.0
  %246 = vmatprep.subr.mxu0 0.0
  %247 = vmatpush2.msra.mxu0 0.0
  %248 = vmatprep.subr.mxu0 0.0
  %249 = vmatpush2.msra.mxu0 0.0
  %250 = vmatprep.mubr.f32.mxu0 0.0
  %251 = vmatmul.mubr.f32.gmra.mxu0 %v184
  %v252 = vpop.f32.mrf.mxu0
  %v253 = vadd.f32 0.0, %v252
  %v254 = vpop.f32.mrf.mxu0
  %255 = vdwg.mxu0
  %256 = vst.msk [vmem:[%s3] sm:$0xff] %vm19, 0.0
  %257 = vst.msk [vmem:[%s3 + $0x8] sm:$0xff] %vm19, 0.0
  %258 = vst.msk [vmem:[%s3 + $0x10] sm:$0xff] %vm19, 0.0
  %259 = vst.msk [vmem:[%s3 + $0x18] sm:$0xff] %vm19, 0.0
  %260 = vst.msk [vmem:[%s3 + $0x20] sm:$0xff] %vm19, 0.0
  %261 = vst.msk [vmem:[%s3 + $0x28] sm:$0xff] %vm19, 0.0
  %262 = vst.msk [vmem:[%s3 + $0x30] sm:$0xff] %vm19, 0.0
  %263 = vst.msk [vmem:[%s3 + $0x38] sm:$0xff] %vm19, 0.0
  %264 = vst.msk [vmem:[%s3 + $0x40] sm:$0xff] %vm19, 0.0
  %265 = vst.msk [vmem:[%s3 + $0x48] sm:$0xff] %vm19, 0.0
  %266 = vst.msk [vmem:[%s3 + $0x50] sm:$0xff] %vm19, 0.0
  %267 = vst.msk [vmem:[%s3 + $0x58] sm:$0xff] %vm19, 0.0
  %268 = vst.msk [vmem:[%s3 + $0x60] sm:$0xff] %vm19, 0.0
  %269 = vst.msk [vmem:[%s3 + $0x68] sm:$0xff] %vm19, 0.0
  %270 = vst.msk [vmem:[%s3 + $0x70] sm:$0xff] %vm19, 0.0
  %271 = vst.msk [vmem:[%s3 + $0x78] sm:$0xff] %vm19, 0.0
  %272 = vst.msk [vmem:[%s3] sm:$0xff] %vm19, %v253
  // Predicated region
  $region14: #{semi_model_forward.2} parent=0 // pred_check
    _
  $region15: #{semi_model_forward.2} parent=0 // pred_check_branch
    %274 = sbr.rel (0) target = $region17
  $region16: #{semi_model_forward.2} parent=0 // pred_region
    _
  $region17: #{semi_model_forward.2} parent=0 // pred_fallthru
    _
  // Predicated region
  $region18: #{semi_model_forward.2} parent=0 // pred_check
    _
  $region19: #{semi_model_forward.2} parent=0 // pred_check_branch
    %276 = sbr.rel (0) target = $region21
  $region20: #{semi_model_forward.2} parent=0 // pred_region
    _
  $region21: #{semi_model_forward.2} parent=0 // pred_fallthru
    _

// kernel: semi_model_forward.3
$region0: #{semi_model_forward.3}
  #allocation0 [shape = 'u32[]', space=smem, size = 0x4, offset = 0x4, fixed_abs, tag = 'smem constant byte address 0x4 - core index']
  #allocation1 [shape = 'u32[144,128]{1,0:T(1,128)}', space=vmem, size = 0x12000, scoped, tag = 'internal scratch']
  %s0 = inlined_call_operand.vmem [shape: s32[8,8], index: 0, kind: input, shape index: {}]
  %s1 = inlined_call_operand.vmem [shape: f32[8,8], index: 1, kind: input, shape index: {}]
  %s2 = inlined_call_operand.vmem [shape: bf16[64,32], index: 2, kind: input, shape index: {}]
  %s3 = inlined_call_operand.vmem [shape: f32[32,32], index: 3, kind: input, shape index: {}]
  %s4 = inlined_call_operand.vmem [shape: f32[1,32], index: 4, kind: input, shape index: {}]
  %s5 = inlined_call_operand.vmem [shape: f32[8,32], index: 5, kind: input, shape index: {}]
  %s6 = inlined_call_operand.vmem [shape: f32[128,32], index: 6, kind: input, shape index: {}]
  %s7 = inlined_call_operand.vmem [shape: f32[8,32], index: 7, kind: output, shape index: {0}]
  %s8 = inlined_call_operand.vmem [shape: f32[8,32], index: 8, kind: output, shape index: {1}]
  %s9 = inlined_call_operand.vmem [shape: s32[8,128], index: 9, kind: output, shape index: {2}]
  %s10 = inlined_call_operand.vmem [shape: f32[8,128], index: 10, kind: output, shape index: {3}]
  %11 = xla_tuple %s7, %s8, %s9, %s10
  %s12 = sld [smem:[#allocation0]]
  $region62: #{semi_model_forward.3} parent=0
    _
  %s14 = ssub.s32 1, %s12
  %s15 = scalar_select 0, %s14, %s12
  // Predicated region
  $region2: #{semi_model_forward.3} parent=0 // pred_check
    _
  $region3: #{semi_model_forward.3} parent=0 // pred_check_branch
    %17 = sbr.rel (0) target = $region5
  $region4: #{semi_model_forward.3} parent=0 // pred_region
    _
  $region5: #{semi_model_forward.3} parent=0 // pred_fallthru
    _
  // Predicated region
  $region6: #{semi_model_forward.3} parent=0 // pred_check
    _
  $region7: #{semi_model_forward.3} parent=0 // pred_check_branch
    %19 = sbr.rel (0) target = $region9
  $region8: #{semi_model_forward.3} parent=0 // pred_region
    _
  $region9: #{semi_model_forward.3} parent=0 // pred_fallthru
    _
  // Predicated region
  $region10: #{semi_model_forward.3} parent=0 // pred_check
    _
  $region11: #{semi_model_forward.3} parent=0 // pred_check_branch
    %21 = sbr.rel (0) target = $region13
  $region12: #{semi_model_forward.3} parent=0 // pred_region
    _
  $region13: #{semi_model_forward.3} parent=0 // pred_fallthru
    _
  // Predicated region
  $region14: #{semi_model_forward.3} parent=0 // pred_check
    _
  $region15: #{semi_model_forward.3} parent=0 // pred_check_branch
    %23 = sbr.rel (0) target = $region17
  $region16: #{semi_model_forward.3} parent=0 // pred_region
    _
  $region17: #{semi_model_forward.3} parent=0 // pred_fallthru
    _
  // Predicated region
  $region18: #{semi_model_forward.3} parent=0 // pred_check
    _
  $region19: #{semi_model_forward.3} parent=0 // pred_check_branch
    %25 = sbr.rel (0) target = $region21
  $region20: #{semi_model_forward.3} parent=0 // pred_region
    _
  $region21: #{semi_model_forward.3} parent=0 // pred_fallthru
    _
  // Predicated region
  $region22: #{semi_model_forward.3} parent=0 // pred_check
    _
  $region23: #{semi_model_forward.3} parent=0 // pred_check_branch
    %27 = sbr.rel (0) target = $region25
  $region24: #{semi_model_forward.3} parent=0 // pred_region
    _
  $region25: #{semi_model_forward.3} parent=0 // pred_fallthru
    _
  // Predicated region
  $region26: #{semi_model_forward.3} parent=0 // pred_check
    _
  $region27: #{semi_model_forward.3} parent=0 // pred_check_branch
    %29 = sbr.rel (0) target = $region29
  $region28: #{semi_model_forward.3} parent=0 // pred_region
    _
  $region29: #{semi_model_forward.3} parent=0 // pred_fallthru
    _
  %v31 = vld [vmem:[%s0] sm:$0xff]
  %v32 = vld [vmem:[%s1] sm:$0xff]
  %v33 = vlaneseq
  %v34 = vand.u32 %v33, 127
  %v35 = vlaneseq
  %v36 = vshrl.u32 %v35, 7
  %v37 = vsub.s32 0, %v36
  %v38 = vrot.slane %v31, %v37
  %40 = vbcast.lane.b32.xlu0 %v38, 256
  %v41 = vpop.permute.xlu0 %40
  %v42 = vlaneseq
  %v43 = vshrl.u32 %v42, 7
  %v44 = vsub.s32 1, %v43
  %v45 = vrot.slane %v31, %v44
  %47 = vbcast.lane.b32.xlu0 %v45, 256
  %v48 = vpop.permute.xlu0 %47
  %v49 = vlaneseq
  %v50 = vshrl.u32 %v49, 7
  %v51 = vsub.s32 2, %v50
  %v52 = vrot.slane %v31, %v51
  %54 = vbcast.lane.b32.xlu0 %v52, 256
  %v55 = vpop.permute.xlu0 %54
  %v56 = vlaneseq
  %v57 = vshrl.u32 %v56, 7
  %v58 = vsub.s32 3, %v57
  %v59 = vrot.slane %v31, %v58
  %61 = vbcast.lane.b32.xlu0 %v59, 256
  %v62 = vpop.permute.xlu0 %61
  %v63 = vlaneseq
  %v64 = vshrl.u32 %v63, 7
  %v65 = vsub.s32 4, %v64
  %v66 = vrot.slane %v31, %v65
  %68 = vbcast.lane.b32.xlu0 %v66, 256
  %v69 = vpop.permute.xlu0 %68
  %v70 = vlaneseq
  %v71 = vshrl.u32 %v70, 7
  %v72 = vsub.s32 5, %v71
  %v73 = vrot.slane %v31, %v72
  %75 = vbcast.lane.b32.xlu0 %v73, 256
  %v76 = vpop.permute.xlu0 %75
  %v77 = vlaneseq
  %v78 = vshrl.u32 %v77, 7
  %v79 = vsub.s32 6, %v78
  %v80 = vrot.slane %v31, %v79
  %82 = vbcast.lane.b32.xlu0 %v80, 256
  %v83 = vpop.permute.xlu0 %82
  %v84 = vlaneseq
  %v85 = vshrl.u32 %v84, 7
  %v86 = vsub.s32 7, %v85
  %v87 = vrot.slane %v31, %v86
  %89 = vbcast.lane.b32.xlu0 %v87, 256
  %v90 = vpop.permute.xlu0 %89
  %vm91 = vcmp.eq.s32.totalorder %v34, %v41
  %vm92 = vcmp.eq.s32.totalorder %v34, %v48
  %vm93 = vcmp.eq.s32.totalorder %v34, %v55
  %vm94 = vcmp.eq.s32.totalorder %v34, %v62
  %vm95 = vcmp.eq.s32.totalorder %v34, %v69
  %vm96 = vcmp.eq.s32.totalorder %v34, %v76
  %vm97 = vcmp.eq.s32.totalorder %v34, %v83
  %vm98 = vcmp.eq.s32.totalorder %v34, %v90
  %v99 = vlaneseq
  %v100 = vshrl.u32 %v99, 7
  %v101 = vsub.s32 0, %v100
  %v102 = vrot.slane %v32, %v101
  %104 = vbcast.lane.b32.xlu0 %v102, 256
  %v105 = vpop.permute.xlu0 %104
  %v106 = vlaneseq
  %v107 = vshrl.u32 %v106, 7
  %v108 = vsub.s32 1, %v107
  %v109 = vrot.slane %v32, %v108
  %111 = vbcast.lane.b32.xlu0 %v109, 256
  %v112 = vpop.permute.xlu0 %111
  %v113 = vlaneseq
  %v114 = vshrl.u32 %v113, 7
  %v115 = vsub.s32 2, %v114
  %v116 = vrot.slane %v32, %v115
  %118 = vbcast.lane.b32.xlu0 %v116, 256
  %v119 = vpop.permute.xlu0 %118
  %v120 = vlaneseq
  %v121 = vshrl.u32 %v120, 7
  %v122 = vsub.s32 3, %v121
  %v123 = vrot.slane %v32, %v122
  %125 = vbcast.lane.b32.xlu0 %v123, 256
  %v126 = vpop.permute.xlu0 %125
  %v127 = vlaneseq
  %v128 = vshrl.u32 %v127, 7
  %v129 = vsub.s32 4, %v128
  %v130 = vrot.slane %v32, %v129
  %132 = vbcast.lane.b32.xlu0 %v130, 256
  %v133 = vpop.permute.xlu0 %132
  %v134 = vlaneseq
  %v135 = vshrl.u32 %v134, 7
  %v136 = vsub.s32 5, %v135
  %v137 = vrot.slane %v32, %v136
  %139 = vbcast.lane.b32.xlu0 %v137, 256
  %v140 = vpop.permute.xlu0 %139
  %v141 = vlaneseq
  %v142 = vshrl.u32 %v141, 7
  %v143 = vsub.s32 6, %v142
  %v144 = vrot.slane %v32, %v143
  %146 = vbcast.lane.b32.xlu0 %v144, 256
  %v147 = vpop.permute.xlu0 %146
  %v148 = vlaneseq
  %v149 = vshrl.u32 %v148, 7
  %v150 = vsub.s32 7, %v149
  %v151 = vrot.slane %v32, %v150
  %153 = vbcast.lane.b32.xlu0 %v151, 256
  %v154 = vpop.permute.xlu0 %153
  %v155 = vsel %vm91, %v105, 0.0
  %v156 = vsel %vm92, %v112, 0.0
  %v157 = vsel %vm93, %v119, 0.0
  %v158 = vsel %vm94, %v126, 0.0
  %v159 = vsel %vm95, %v133, 0.0
  %v160 = vsel %vm96, %v140, 0.0
  %v161 = vsel %vm97, %v147, 0.0
  %v162 = vsel %vm98, %v154, 0.0
  %vm163 = vcmask 523264
  %v164 = vsel %vm163, %v155, 0.0
  %v165 = vrot.slane %v164, 4
  %v166 = vadd.f32 %v164, %v165
  %v167 = vrot.slane %v166, 2
  %v168 = vadd.f32 %v166, %v167
  %v169 = vrot.slane %v168, 1
  %v170 = vadd.f32 %v168, %v169
  %v171 = vsel %vm163, %v156, 0.0
  %v172 = vrot.slane %v171, 4
  %v173 = vadd.f32 %v171, %v172
  %v174 = vrot.slane %v173, 2
  %v175 = vadd.f32 %v173, %v174
  %v176 = vrot.slane %v175, 1
  %v177 = vadd.f32 %v175, %v176
  %v178 = vsel %vm163, %v157, 0.0
  %v179 = vrot.slane %v178, 4
  %v180 = vadd.f32 %v178, %v179
  %v181 = vrot.slane %v180, 2
  %v182 = vadd.f32 %v180, %v181
  %v183 = vrot.slane %v182, 1
  %v184 = vadd.f32 %v182, %v183
  %v185 = vsel %vm163, %v158, 0.0
  %v186 = vrot.slane %v185, 4
  %v187 = vadd.f32 %v185, %v186
  %v188 = vrot.slane %v187, 2
  %v189 = vadd.f32 %v187, %v188
  %v190 = vrot.slane %v189, 1
  %v191 = vadd.f32 %v189, %v190
  %v192 = vsel %vm163, %v159, 0.0
  %v193 = vrot.slane %v192, 4
  %v194 = vadd.f32 %v192, %v193
  %v195 = vrot.slane %v194, 2
  %v196 = vadd.f32 %v194, %v195
  %v197 = vrot.slane %v196, 1
  %v198 = vadd.f32 %v196, %v197
  %v199 = vsel %vm163, %v160, 0.0
  %v200 = vrot.slane %v199, 4
  %v201 = vadd.f32 %v199, %v200
  %v202 = vrot.slane %v201, 2
  %v203 = vadd.f32 %v201, %v202
  %v204 = vrot.slane %v203, 1
  %v205 = vadd.f32 %v203, %v204
  %v206 = vsel %vm163, %v161, 0.0
  %v207 = vrot.slane %v206, 4
  %v208 = vadd.f32 %v206, %v207
  %v209 = vrot.slane %v208, 2
  %v210 = vadd.f32 %v208, %v209
  %v211 = vrot.slane %v210, 1
  %v212 = vadd.f32 %v210, %v211
  %v213 = vsel %vm163, %v162, 0.0
  %v214 = vrot.slane %v213, 4
  %v215 = vadd.f32 %v213, %v214
  %v216 = vrot.slane %v215, 2
  %v217 = vadd.f32 %v215, %v216
  %v218 = vrot.slane %v217, 1
  %v219 = vadd.f32 %v217, %v218
  %vm220 = vcmask 64512
  %v221 = vsel %vm220, %v32, 0.0
  %222 = vadd.xlane.f32.xlu0 %v221
  %v223 = vpop.xlane.xlu0 %222
  %v224 = vpack.c.bf16 %v170, %v170
  %v225 = vpack.c.bf16 %v177, %v177
  %v226 = vpack.c.bf16 %v184, %v184
  %v227 = vpack.c.bf16 %v191, %v191
  %v228 = vpack.c.bf16 %v198, %v198
  %v229 = vpack.c.bf16 %v205, %v205
  %v230 = vpack.c.bf16 %v212, %v212
  %v231 = vpack.c.bf16 %v219, %v219
  %v232 = vld [vmem:[%s2] sm:$0xf]
  %v233 = vld [vmem:[%s2 + $0x4] sm:$0xf]
  %v234 = vld [vmem:[%s2 + $0x8] sm:$0xf]
  %v235 = vld [vmem:[%s2 + $0xc] sm:$0xf]
  %v236 = vld [vmem:[%s2 + $0x10] sm:$0xf]
  %v237 = vld [vmem:[%s2 + $0x14] sm:$0xf]
  %v238 = vld [vmem:[%s2 + $0x18] sm:$0xf]
  %v239 = vld [vmem:[%s2 + $0x1c] sm:$0xf]
  %v248 = vunpack.c.l.b16 %v224
  %v249 = vunpack.c.l.b16 %v225
  %v250 = vunpack.c.l.b16 %v226
  %v251 = vunpack.c.l.b16 %v227
  %v252 = vunpack.c.l.b16 %v228
  %v253 = vunpack.c.l.b16 %v229
  %v254 = vunpack.c.l.b16 %v230
  %v255 = vunpack.c.l.b16 %v231
  %vm256 = vcmask 1041409
  %v257 = vsel %vm256, %v249, %v248
  %vm258 = vcmask 1042434
  %v259 = vsel %vm258, %v250, %v257
  %vm260 = vcmask 1043459
  %v261 = vsel %vm260, %v251, %v259
  %vm262 = vcmask 1044484
  %v263 = vsel %vm262, %v252, %v261
  %vm264 = vcmask 1045509
  %v265 = vsel %vm264, %v253, %v263
  %vm266 = vcmask 1046534
  %v267 = vsel %vm266, %v254, %v265
  %vm268 = vcmask 1047559
  %v269 = vsel %vm268, %v255, %v267
  %v270 = vpack.c.b16 %v269, %v269
  %v279 = vunpack.c.l.b16 %v232
  %v280 = vunpack.c.l.b16 %v233
  %v281 = vunpack.c.l.b16 %v234
  %v282 = vunpack.c.l.b16 %v235
  %v283 = vunpack.c.l.b16 %v236
  %v284 = vunpack.c.l.b16 %v237
  %v285 = vunpack.c.l.b16 %v238
  %v286 = vunpack.c.l.b16 %v239
  %v287 = vpack.c.b16 %v280, %v279
  %v288 = vpack.c.b16 %v282, %v281
  %v289 = vpack.c.b16 %v284, %v283
  %v290 = vpack.c.b16 %v286, %v285
  %v296 = vsel %vm163, %v270, 0
  %298 = vmatprep.subr.bf16.mxu0 0
  %299 = vmatpush1.bf16.msra.mxu0 0
  %300 = vmatprep.subr.bf16.mxu0 0
  %301 = vmatpush1.bf16.msra.mxu0 0
  %302 = vmatprep.subr.bf16.mxu0 0
  %303 = vmatpush1.bf16.msra.mxu0 0
  %304 = vmatprep.subr.bf16.mxu0 0
  %305 = vmatpush1.bf16.msra.mxu0 0
  %306 = vmatprep.subr.bf16.mxu0 0
  %307 = vmatpush1.bf16.msra.mxu0 %v290
  %308 = vmatprep.subr.bf16.mxu0 0
  %309 = vmatpush1.bf16.msra.mxu0 %v289
  %310 = vmatprep.subr.bf16.mxu0 0
  %311 = vmatpush1.bf16.msra.mxu0 %v288
  %312 = vmatprep.subr.bf16.mxu0 0
  %313 = vmatpush1.bf16.msra.mxu0 %v287
  %314 = vmatprep.subr.bf16.mxu0 0
  %315 = vmatpush2.bf16.msra.mxu0 0
  %316 = vmatprep.subr.bf16.mxu0 0
  %317 = vmatpush2.bf16.msra.mxu0 0
  %318 = vmatprep.subr.bf16.mxu0 0
  %319 = vmatpush2.bf16.msra.mxu0 0
  %320 = vmatprep.subr.bf16.mxu0 0
  %321 = vmatpush2.bf16.msra.mxu0 0
  %322 = vmatprep.subr.bf16.mxu0 0
  %323 = vmatpush2.bf16.msra.mxu0 0
  %324 = vmatprep.subr.bf16.mxu0 0
  %325 = vmatpush2.bf16.msra.mxu0 0
  %326 = vmatprep.subr.bf16.mxu0 0
  %327 = vmatpush2.bf16.msra.mxu0 0
  %328 = vmatprep.subr.bf16.mxu0 0
  %329 = vmatpush2.bf16.msra.mxu0 0
  %330 = vmatprep.mubr.bf16.mxu0 0
  %331 = vmatmul.mubr.bf16.gmra.mxu0 %v296
  %v332 = vpop.f32.mrf.mxu0
  %v333 = vadd.f32 0.0, %v332
  %v334 = vpop.f32.mrf.mxu0
  %v335 = vpop.f32.mrf.mxu0
  %v336 = vpop.f32.mrf.mxu0
  %337 = vdwg.mxu0
  %v338 = vmax.f32 %v223, 1.0
  %v339 = vrcp.pop %v338
  %v340 = vmul.f32 %v333, %v339
  %v341 = vld [vmem:[%s3] sm:$0xff]
  %v342 = vld [vmem:[%s3 + $0x8] sm:$0xff]
  %v343 = vld [vmem:[%s3 + $0x10] sm:$0xff]
  %v344 = vld [vmem:[%s3 + $0x18] sm:$0xff]
  %v345 = vld [vmem:[%s4] sm:$0x1]
  %v347 = vlaneseq
  %v348 = vshrl.u32 %v347, 7
  %v349 = vsub.s32 0, %v348
  %v350 = vrot.slane %v345, %v349
  %vm352 = vcmask 261120
  %v354 = vsel %vm352, %v340, 0
  %356 = vmatprep.subr.mxu0 0.0
  %357 = vmatpush1.msra.mxu0 0.0
  %358 = vmatprep.subr.mxu0 0.0
  %359 = vmatpush1.msra.mxu0 0.0
  %360 = vmatprep.subr.mxu0 0.0
  %361 = vmatpush1.msra.mxu0 0.0
  %362 = vmatprep.subr.mxu0 0.0
  %363 = vmatpush1.msra.mxu0 0.0
  %364 = vmatprep.subr.mxu0 0.0
  %365 = vmatpush1.msra.mxu0 0.0
  %366 = vmatprep.subr.mxu0 0.0
  %367 = vmatpush1.msra.mxu0 0.0
  %368 = vmatprep.subr.mxu0 0.0
  %369 = vmatpush1.msra.mxu0 0.0
  %370 = vmatprep.subr.mxu0 0.0
  %371 = vmatpush1.msra.mxu0 0.0
  %372 = vmatprep.subr.mxu0 0.0
  %373 = vmatpush1.msra.mxu0 0.0
  %374 = vmatprep.subr.mxu0 0.0
  %375 = vmatpush1.msra.mxu0 0.0
  %376 = vmatprep.subr.mxu0 0.0
  %377 = vmatpush1.msra.mxu0 0.0
  %378 = vmatprep.subr.mxu0 0.0
  %379 = vmatpush1.msra.mxu0 0.0
  %380 = vmatprep.subr.mxu0 0.0
  %381 = vmatpush1.msra.mxu0 %v344
  %382 = vmatprep.subr.mxu0 0.0
  %383 = vmatpush1.msra.mxu0 %v343
  %384 = vmatprep.subr.mxu0 0.0
  %385 = vmatpush1.msra.mxu0 %v342
  %386 = vmatprep.subr.mxu0 0.0
  %387 = vmatpush1.msra.mxu0 %v341
  %388 = vmatprep.subr.mxu0 0.0
  %389 = vmatpush2.msra.mxu0 0.0
  %390 = vmatprep.subr.mxu0 0.0
  %391 = vmatpush2.msra.mxu0 0.0
  %392 = vmatprep.subr.mxu0 0.0
  %393 = vmatpush2.msra.mxu0 0.0
  %394 = vmatprep.subr.mxu0 0.0
  %395 = vmatpush2.msra.mxu0 0.0
  %396 = vmatprep.subr.mxu0 0.0
  %397 = vmatpush2.msra.mxu0 0.0
  %398 = vmatprep.subr.mxu0 0.0
  %399 = vmatpush2.msra.mxu0 0.0
  %400 = vmatprep.subr.mxu0 0.0
  %401 = vmatpush2.msra.mxu0 0.0
  %402 = vmatprep.subr.mxu0 0.0
  %403 = vmatpush2.msra.mxu0 0.0
  %404 = vmatprep.subr.mxu0 0.0
  %405 = vmatpush2.msra.mxu0 0.0
  %406 = vmatprep.subr.mxu0 0.0
  %407 = vmatpush2.msra.mxu0 0.0
  %408 = vmatprep.subr.mxu0 0.0
  %409 = vmatpush2.msra.mxu0 0.0
  %410 = vmatprep.subr.mxu0 0.0
  %411 = vmatpush2.msra.mxu0 0.0
  %412 = vmatprep.subr.mxu0 0.0
  %413 = vmatpush2.msra.mxu0 0.0
  %414 = vmatprep.subr.mxu0 0.0
  %415 = vmatpush2.msra.mxu0 0.0
  %416 = vmatprep.subr.mxu0 0.0
  %417 = vmatpush2.msra.mxu0 0.0
  %418 = vmatprep.subr.mxu0 0.0
  %419 = vmatpush2.msra.mxu0 0.0
  %420 = vmatprep.mubr.f32.mxu0 0.0
  %421 = vmatmul.mubr.f32.gmra.mxu0 %v354
  %v422 = vpop.f32.mrf.mxu0
  %v423 = vadd.f32 %v350, %v422
  %v424 = vpop.f32.mrf.mxu0
  %425 = vdwg.mxu0
  %v426 = vtanh.pop %v423
  %427 = vst.msk [vmem:[%s7] sm:$0xff] %vm352, %v426
  %v428 = vld [vmem:[%s5] sm:$0xff]
  %v430 = vsel %vm352, %v426, 0
  %v433 = vsel %vm352, %v428, 0
  %435 = vmatprep.subr.mxu0 0.0
  %436 = vmatpush1.xpose.msra.mxu0 0.0
  %437 = vmatprep.subr.mxu0 0.0
  %438 = vmatpush1.xpose.msra.mxu0 0.0
  %439 = vmatprep.subr.mxu0 0.0
  %440 = vmatpush1.xpose.msra.mxu0 0.0
  %441 = vmatprep.subr.mxu0 0.0
  %442 = vmatpush1.xpose.msra.mxu0 0.0
  %443 = vmatprep.subr.mxu0 0.0
  %444 = vmatpush1.xpose.msra.mxu0 0.0
  %445 = vmatprep.subr.mxu0 0.0
  %446 = vmatpush1.xpose.msra.mxu0 0.0
  %447 = vmatprep.subr.mxu0 0.0
  %448 = vmatpush1.xpose.msra.mxu0 0.0
  %449 = vmatprep.subr.mxu0 0.0
  %450 = vmatpush1.xpose.msra.mxu0 0.0
  %451 = vmatprep.subr.mxu0 0.0
  %452 = vmatpush1.xpose.msra.mxu0 0.0
  %453 = vmatprep.subr.mxu0 0.0
  %454 = vmatpush1.xpose.msra.mxu0 0.0
  %455 = vmatprep.subr.mxu0 0.0
  %456 = vmatpush1.xpose.msra.mxu0 0.0
  %457 = vmatprep.subr.mxu0 0.0
  %458 = vmatpush1.xpose.msra.mxu0 0.0
  %459 = vmatprep.subr.mxu0 0.0
  %460 = vmatpush1.xpose.msra.mxu0 0.0
  %461 = vmatprep.subr.mxu0 0.0
  %462 = vmatpush1.xpose.msra.mxu0 0.0
  %463 = vmatprep.subr.mxu0 0.0
  %464 = vmatpush1.xpose.msra.mxu0 0.0
  %465 = vmatprep.subr.mxu0 0.0
  %466 = vmatpush1.xpose.msra.mxu0 %v433
  %467 = vmatprep.subr.mxu0 0.0
  %468 = vmatpush2.xpose.msra.mxu0 0.0
  %469 = vmatprep.subr.mxu0 0.0
  %470 = vmatpush2.xpose.msra.mxu0 0.0
  %471 = vmatprep.subr.mxu0 0.0
  %472 = vmatpush2.xpose.msra.mxu0 0.0
  %473 = vmatprep.subr.mxu0 0.0
  %474 = vmatpush2.xpose.msra.mxu0 0.0
  %475 = vmatprep.subr.mxu0 0.0
  %476 = vmatpush2.xpose.msra.mxu0 0.0
  %477 = vmatprep.subr.mxu0 0.0
  %478 = vmatpush2.xpose.msra.mxu0 0.0
  %479 = vmatprep.subr.mxu0 0.0
  %480 = vmatpush2.xpose.msra.mxu0 0.0
  %481 = vmatprep.subr.mxu0 0.0
  %482 = vmatpush2.xpose.msra.mxu0 0.0
  %483 = vmatprep.subr.mxu0 0.0
  %484 = vmatpush2.xpose.msra.mxu0 0.0
  %485 = vmatprep.subr.mxu0 0.0
  %486 = vmatpush2.xpose.msra.mxu0 0.0
  %487 = vmatprep.subr.mxu0 0.0
  %488 = vmatpush2.xpose.msra.mxu0 0.0
  %489 = vmatprep.subr.mxu0 0.0
  %490 = vmatpush2.xpose.msra.mxu0 0.0
  %491 = vmatprep.subr.mxu0 0.0
  %492 = vmatpush2.xpose.msra.mxu0 0.0
  %493 = vmatprep.subr.mxu0 0.0
  %494 = vmatpush2.xpose.msra.mxu0 0.0
  %495 = vmatprep.subr.mxu0 0.0
  %496 = vmatpush2.xpose.msra.mxu0 0.0
  %497 = vmatprep.subr.mxu0 0.0
  %498 = vmatpush2.xpose.msra.mxu0 0.0
  %499 = vmatprep.mubr.f32.mxu0 0.0
  %500 = vmatmul.mubr.f32.gmra.mxu0 %v430
  %v501 = vpop.f32.mrf.mxu0
  %v502 = vadd.f32 0.0, %v501
  %v503 = vpop.f32.mrf.mxu0
  %504 = vdwg.mxu0
  %v505 = vmul.f32 %v426, %v426
  %v506 = vsel %vm352, %v505, 0.0
  %507 = vadd.xlane.f32.xlu0 %v506
  %v508 = vpop.xlane.xlu0 %507
  %v509 = vmul.f32 %v502, 2.0
  %v510 = vsub.f32 %v508, %v509
  %v511 = vmul.f32 %v428, %v428
  %v512 = vsel %vm352, %v511, 0.0
  %513 = vadd.xlane.f32.xlu0 %v512
  %v514 = vpop.xlane.xlu0 %513
  %v516 = vlaneseq
  %v517 = vshrl.u32 %v516, 7
  %v518 = vsub.s32 %v34, %v517
  %v519 = vrot.slane %v514, %v518
  %v520 = vsel %vm258, %v519, %v519
  %v521 = vsel %vm260, %v519, %v520
  %v522 = vsel %vm262, %v519, %v521
  %v523 = vsel %vm264, %v519, %v522
  %v524 = vsel %vm266, %v519, %v523
  %v525 = vsel %vm268, %v519, %v524
  %v527 = vadd.f32 %v510, %v525
  %v528 = vsel %vm220, %v527, inf
  %529 = vmin.xlane.f32.xlu0 %v528
  %v530 = vpop.xlane.xlu0 %529
  %vm531 = vcmp.le.f32.partialorder %v527, %v530
  %v532 = vsel %vm531, %v34, 8
  %v533 = vsel %vm220, %v532, 2147483647
  %v534 = vand.u32 %v533, 65535
  %v535 = vshra.s32 %v533, 16
  %v536 = vcvt.s32.f32 %v534
  %v537 = vcvt.s32.f32 %v535
  %538 = vmin.xlane.f32.xlu0 %v537
  %v539 = vpop.xlane.xlu0 %538
  %vm540 = vcmp.eq.f32.partialorder %v537, %v539
  %v541 = vsel %vm540, %v536, inf
  %542 = vmin.xlane.f32.xlu0 %v541
  %v543 = vpop.xlane.xlu0 %542
  %v544 = vcvt.f32.s32 %v543
  %v545 = vcvt.f32.s32 %v539
  %v546 = vshll.u32 %v545, 16
  %v547 = vadd.s32 %v546, %v544
  %548 = vst [vmem:[%s9] sm:$0xff] %v547
  %vm549 = vcmp.eq.s32.totalorder %v34, %v547
  %v550 = vsel %vm549, 1, 0
  %v551 = vcvt.s32.f32 %v550
  %v553 = vsel %vm220, %v551, 0
  %555 = vmatprep.subr.mxu0 0.0
  %556 = vmatpush1.msra.mxu0 0.0
  %557 = vmatprep.subr.mxu0 0.0
  %558 = vmatpush1.msra.mxu0 0.0
  %559 = vmatprep.subr.mxu0 0.0
  %560 = vmatpush1.msra.mxu0 0.0
  %561 = vmatprep.subr.mxu0 0.0
  %562 = vmatpush1.msra.mxu0 0.0
  %563 = vmatprep.subr.mxu0 0.0
  %564 = vmatpush1.msra.mxu0 0.0
  %565 = vmatprep.subr.mxu0 0.0
  %566 = vmatpush1.msra.mxu0 0.0
  %567 = vmatprep.subr.mxu0 0.0
  %568 = vmatpush1.msra.mxu0 0.0
  %569 = vmatprep.subr.mxu0 0.0
  %570 = vmatpush1.msra.mxu0 0.0
  %571 = vmatprep.subr.mxu0 0.0
  %572 = vmatpush1.msra.mxu0 0.0
  %573 = vmatprep.subr.mxu0 0.0
  %574 = vmatpush1.msra.mxu0 0.0
  %575 = vmatprep.subr.mxu0 0.0
  %576 = vmatpush1.msra.mxu0 0.0
  %577 = vmatprep.subr.mxu0 0.0
  %578 = vmatpush1.msra.mxu0 0.0
  %579 = vmatprep.subr.mxu0 0.0
  %580 = vmatpush1.msra.mxu0 0.0
  %581 = vmatprep.subr.mxu0 0.0
  %582 = vmatpush1.msra.mxu0 0.0
  %583 = vmatprep.subr.mxu0 0.0
  %584 = vmatpush1.msra.mxu0 0.0
  %585 = vmatprep.subr.mxu0 0.0
  %586 = vmatpush1.msra.mxu0 %v428
  %587 = vmatprep.subr.mxu0 0.0
  %588 = vmatpush2.msra.mxu0 0.0
  %589 = vmatprep.subr.mxu0 0.0
  %590 = vmatpush2.msra.mxu0 0.0
  %591 = vmatprep.subr.mxu0 0.0
  %592 = vmatpush2.msra.mxu0 0.0
  %593 = vmatprep.subr.mxu0 0.0
  %594 = vmatpush2.msra.mxu0 0.0
  %595 = vmatprep.subr.mxu0 0.0
  %596 = vmatpush2.msra.mxu0 0.0
  %597 = vmatprep.subr.mxu0 0.0
  %598 = vmatpush2.msra.mxu0 0.0
  %599 = vmatprep.subr.mxu0 0.0
  %600 = vmatpush2.msra.mxu0 0.0
  %601 = vmatprep.subr.mxu0 0.0
  %602 = vmatpush2.msra.mxu0 0.0
  %603 = vmatprep.subr.mxu0 0.0
  %604 = vmatpush2.msra.mxu0 0.0
  %605 = vmatprep.subr.mxu0 0.0
  %606 = vmatpush2.msra.mxu0 0.0
  %607 = vmatprep.subr.mxu0 0.0
  %608 = vmatpush2.msra.mxu0 0.0
  %609 = vmatprep.subr.mxu0 0.0
  %610 = vmatpush2.msra.mxu0 0.0
  %611 = vmatprep.subr.mxu0 0.0
  %612 = vmatpush2.msra.mxu0 0.0
  %613 = vmatprep.subr.mxu0 0.0
  %614 = vmatpush2.msra.mxu0 0.0
  %615 = vmatprep.subr.mxu0 0.0
  %616 = vmatpush2.msra.mxu0 0.0
  %617 = vmatprep.subr.mxu0 0.0
  %618 = vmatpush2.msra.mxu0 0.0
  %619 = vmatprep.mubr.f32.mxu0 0.0
  %620 = vmatmul.mubr.f32.gmra.mxu0 %v553
  %v621 = vpop.f32.mrf.mxu0
  %v622 = vadd.f32 0.0, %v621
  %v623 = vpop.f32.mrf.mxu0
  %624 = vdwg.mxu0
  %625 = vst.msk [vmem:[%s8] sm:$0xff] %vm352, %v622
  %v626 = vld [vmem:[%s6] sm:$0xff]
  %v627 = vld [vmem:[%s6 + $0x8] sm:$0xff]
  %v628 = vld [vmem:[%s6 + $0x10] sm:$0xff]
  %v629 = vld [vmem:[%s6 + $0x18] sm:$0xff]
  %v630 = vld [vmem:[%s6 + $0x20] sm:$0xff]
  %v631 = vld [vmem:[%s6 + $0x28] sm:$0xff]
  %v632 = vld [vmem:[%s6 + $0x30] sm:$0xff]
  %v633 = vld [vmem:[%s6 + $0x38] sm:$0xff]
  %v634 = vld [vmem:[%s6 + $0x40] sm:$0xff]
  %v635 = vld [vmem:[%s6 + $0x48] sm:$0xff]
  %v636 = vld [vmem:[%s6 + $0x50] sm:$0xff]
  %v637 = vld [vmem:[%s6 + $0x58] sm:$0xff]
  %v638 = vld [vmem:[%s6 + $0x60] sm:$0xff]
  %v639 = vld [vmem:[%s6 + $0x68] sm:$0xff]
  %v640 = vld [vmem:[%s6 + $0x70] sm:$0xff]
  %v641 = vld [vmem:[%s6 + $0x78] sm:$0xff]
  %v643 = vsel %vm352, %v626, 0
  %v646 = vsel %vm352, %v627, 0
  %v649 = vsel %vm352, %v628, 0
  %v652 = vsel %vm352, %v629, 0
  %v655 = vsel %vm352, %v630, 0
  %v658 = vsel %vm352, %v631, 0
  %v661 = vsel %vm352, %v632, 0
  %v664 = vsel %vm352, %v633, 0
  %v667 = vsel %vm352, %v634, 0
  %v670 = vsel %vm352, %v635, 0
  %v673 = vsel %vm352, %v636, 0
  %v676 = vsel %vm352, %v637, 0
  %v679 = vsel %vm352, %v638, 0
  %v682 = vsel %vm352, %v639, 0
  %v685 = vsel %vm352, %v640, 0
  %v688 = vsel %vm352, %v641, 0
  %690 = vmatprep.subr.mxu0 0.0
  %691 = vmatpush1.xpose.msra.mxu0 %v688
  %692 = vmatprep.subr.mxu0 0.0
  %693 = vmatpush1.xpose.msra.mxu0 %v685
  %694 = vmatprep.subr.mxu0 0.0
  %695 = vmatpush1.xpose.msra.mxu0 %v682
  %696 = vmatprep.subr.mxu0 0.0
  %697 = vmatpush1.xpose.msra.mxu0 %v679
  %698 = vmatprep.subr.mxu0 0.0
  %699 = vmatpush1.xpose.msra.mxu0 %v676
  %700 = vmatprep.subr.mxu0 0.0
  %701 = vmatpush1.xpose.msra.mxu0 %v673
  %702 = vmatprep.subr.mxu0 0.0
  %703 = vmatpush1.xpose.msra.mxu0 %v670
  %704 = vmatprep.subr.mxu0 0.0
  %705 = vmatpush1.xpose.msra.mxu0 %v667
  %706 = vmatprep.subr.mxu0 0.0
  %707 = vmatpush1.xpose.msra.mxu0 %v664
  %708 = vmatprep.subr.mxu0 0.0
  %709 = vmatpush1.xpose.msra.mxu0 %v661
  %710 = vmatprep.subr.mxu0 0.0
  %711 = vmatpush1.xpose.msra.mxu0 %v658
  %712 = vmatprep.subr.mxu0 0.0
  %713 = vmatpush1.xpose.msra.mxu0 %v655
  %714 = vmatprep.subr.mxu0 0.0
  %715 = vmatpush1.xpose.msra.mxu0 %v652
  %716 = vmatprep.subr.mxu0 0.0
  %717 = vmatpush1.xpose.msra.mxu0 %v649
  %718 = vmatprep.subr.mxu0 0.0
  %719 = vmatpush1.xpose.msra.mxu0 %v646
  %720 = vmatprep.subr.mxu0 0.0
  %721 = vmatpush1.xpose.msra.mxu0 %v643
  %722 = vmatprep.subr.mxu0 0.0
  %723 = vmatpush2.xpose.msra.mxu0 0.0
  %724 = vmatprep.subr.mxu0 0.0
  %725 = vmatpush2.xpose.msra.mxu0 0.0
  %726 = vmatprep.subr.mxu0 0.0
  %727 = vmatpush2.xpose.msra.mxu0 0.0
  %728 = vmatprep.subr.mxu0 0.0
  %729 = vmatpush2.xpose.msra.mxu0 0.0
  %730 = vmatprep.subr.mxu0 0.0
  %731 = vmatpush2.xpose.msra.mxu0 0.0
  %732 = vmatprep.subr.mxu0 0.0
  %733 = vmatpush2.xpose.msra.mxu0 0.0
  %734 = vmatprep.subr.mxu0 0.0
  %735 = vmatpush2.xpose.msra.mxu0 0.0
  %736 = vmatprep.subr.mxu0 0.0
  %737 = vmatpush2.xpose.msra.mxu0 0.0
  %738 = vmatprep.subr.mxu0 0.0
  %739 = vmatpush2.xpose.msra.mxu0 0.0
  %740 = vmatprep.subr.mxu0 0.0
  %741 = vmatpush2.xpose.msra.mxu0 0.0
  %742 = vmatprep.subr.mxu0 0.0
  %743 = vmatpush2.xpose.msra.mxu0 0.0
  %744 = vmatprep.subr.mxu0 0.0
  %745 = vmatpush2.xpose.msra.mxu0 0.0
  %746 = vmatprep.subr.mxu0 0.0
  %747 = vmatpush2.xpose.msra.mxu0 0.0
  %748 = vmatprep.subr.mxu0 0.0
  %749 = vmatpush2.xpose.msra.mxu0 0.0
  %750 = vmatprep.subr.mxu0 0.0
  %751 = vmatpush2.xpose.msra.mxu0 0.0
  %752 = vmatprep.subr.mxu0 0.0
  %753 = vmatpush2.xpose.msra.mxu0 0.0
  %754 = vmatprep.mubr.f32.mxu0 0.0
  %755 = vmatmul.mubr.f32.gmra.mxu0 %v430
  %v756 = vpop.f32.mrf.mxu0
  %v757 = vadd.f32 0.0, %v756
  %v758 = vpop.f32.mrf.mxu0
  %759 = vdwg.mxu0
  %v760 = vxor.u32 %v757, 2147483648
  %v761 = vmul.f32 %v760, 1.442695
  %v762 = vpow.pop %v761
  %v763 = vadd.f32 %v762, 1.0
  %v764 = vrcp.pop %v763
  %v765 = vmul.f32 1.0, %v764
  %766 = vst [vmem:[%s10] sm:$0xff] %v765
  // Predicated region
  $region30: #{semi_model_forward.3} parent=0 // pred_check
    _
  $region31: #{semi_model_forward.3} parent=0 // pred_check_branch
    %768 = sbr.rel (0) target = $region33
  $region32: #{semi_model_forward.3} parent=0 // pred_region
    _
  $region33: #{semi_model_forward.3} parent=0 // pred_fallthru
    _
  // Predicated region
  $region34: #{semi_model_forward.3} parent=0 // pred_check
    _
  $region35: #{semi_model_forward.3} parent=0 // pred_check_branch
    %770 = sbr.rel (0) target = $region37
  $region36: #{semi_model_forward.3} parent=0 // pred_region
    _
  $region37: #{semi_model_forward.3} parent=0 // pred_fallthru
    _
  // Predicated region
  $region38: #{semi_model_forward.3} parent=0 // pred_check
    _
  $region39: #{semi_model_forward.3} parent=0 // pred_check_branch
    %772 = sbr.rel (0) target = $region41
  $region40: #{semi_model_forward.3} parent=0 // pred_region
    _
  $region41: #{semi_model_forward.3} parent=0 // pred_fallthru
    _
  // Predicated region
  $region42: #{semi_model_forward.3} parent=0 // pred_check
    _
  $region43: #{semi_model_forward.3} parent=0 // pred_check_branch
    %774 = sbr.rel (0) target = $region45
  $region44: #{semi_model_forward.3} parent=0 // pred_region
    _
  $region45: #{semi_model_forward.3} parent=0 // pred_fallthru
    _
  // Predicated region
  $region46: #{semi_model_forward.3} parent=0 // pred_check
    _
  $region47: #{semi_model_forward.3} parent=0 // pred_check_branch
    %776 = sbr.rel (0) target = $region49
  $region48: #{semi_model_forward.3} parent=0 // pred_region
    _
  $region49: #{semi_model_forward.3} parent=0 // pred_fallthru
    _
  // Predicated region
  $region50: #{semi_model_forward.3} parent=0 // pred_check
    _
  $region51: #{semi_model_forward.3} parent=0 // pred_check_branch
    %778 = sbr.rel (0) target = $region53
  $region52: #{semi_model_forward.3} parent=0 // pred_region
    _
  $region53: #{semi_model_forward.3} parent=0 // pred_fallthru
    _
  // Predicated region
  $region54: #{semi_model_forward.3} parent=0 // pred_check
    _
  $region55: #{semi_model_forward.3} parent=0 // pred_check_branch
    %780 = sbr.rel (0) target = $region57
  $region56: #{semi_model_forward.3} parent=0 // pred_region
    _
  $region57: #{semi_model_forward.3} parent=0 // pred_fallthru
    _
  // Predicated region
  $region58: #{semi_model_forward.3} parent=0 // pred_check
    _
  $region59: #{semi_model_forward.3} parent=0 // pred_check_branch
    %782 = sbr.rel (0) target = $region61
  $region60: #{semi_model_forward.3} parent=0 // pred_region
    _
  $region61: #{semi_model_forward.3} parent=0 // pred_fallthru
    _

</llo_original>
